<compile_context>
chip_gen: v5e
topology: v5e:2x2
jax: 0.10.0
libtpu: 0.0.40
codegen_flags: <defaults>
</compile_context>

<pallas_src>
import jax
import jax.numpy as jnp
from jax.experimental import pallas as pl
from jax.experimental.pallas import tpu as pltpu

LANES = 128          # lane width of a vreg
TILE_ROWS = 512      # (512, 128) f32 tile = 256 KiB per buffer
PALLAS_MIN_ELEMS = 8192  # below this, fused XLA is strictly faster


def _scale_bias_relu_kernel(x_ref, w_ref, b_ref, o_ref):
    # x_ref: (TILE_ROWS, LANES) f32 in VMEM; w_ref/b_ref: (1, 1) f32 in SMEM.
    w = w_ref[0, 0]
    b = b_ref[0, 0]
    o_ref[...] = jnp.maximum(x_ref[...] * w + b, 0.0)


def perceptron_forward(x, weight, bias):
    """Equivalent of ReLU(Linear(1,1)(x)).

    x: (B, 1) float, weight: (1, 1) float, bias: (1,) float -> (B, 1) f32.
    """
    orig_shape = x.shape
    x = x.astype(jnp.float32)
    w_scalar = weight.reshape(()).astype(jnp.float32)
    b_scalar = bias.reshape(()).astype(jnp.float32)

    n = x.size  # == B because in_features == 1

    if n < PALLAS_MIN_ELEMS:
        # Tiny inputs: kernel launch + per-step overhead dominates; let XLA
        # fuse the elementwise expression instead.
        return jnp.maximum(x * w_scalar + b_scalar, 0.0)

    # Lane-dense view: flatten and pad up to a whole number of (TILE_ROWS, 128)
    # tiles so every store is an unmasked full-width tile store.
    flat = x.reshape(-1)
    tile_elems = TILE_ROWS * LANES
    padded = pl.cdiv(n, tile_elems) * tile_elems
    if padded != n:
        flat = jnp.pad(flat, (0, padded - n))
    rows = padded // LANES
    x2d = flat.reshape(rows, LANES)

    w2 = w_scalar.reshape(1, 1)
    b2 = b_scalar.reshape(1, 1)

    out2d = pl.pallas_call(
        _scale_bias_relu_kernel,
        out_shape=jax.ShapeDtypeStruct((rows, LANES), jnp.float32),
        grid=(rows // TILE_ROWS,),
        in_specs=[
            pl.BlockSpec((TILE_ROWS, LANES), lambda i: (i, 0)),
            pl.BlockSpec(memory_space=pltpu.MemorySpace.SMEM),  # weight scalar
            pl.BlockSpec(memory_space=pltpu.MemorySpace.SMEM),  # bias scalar
        ],
        out_specs=pl.BlockSpec((TILE_ROWS, LANES), lambda i: (i, 0)),
        compiler_params=pltpu.CompilerParams(
            dimension_semantics=("parallel",),
        ),
    )(x2d, w2, b2)

    # Padding rows produce ReLU(b) which may be nonzero -> slice them off.
    return out2d.reshape(-1)[:n].reshape(orig_shape)


if __name__ == "__main__":
    key = jax.random.PRNGKey(0)
    kx1, kx2, kw, kb = jax.random.split(key, 4)

    # Deterministic parameter init mimicking nn.Linear(1, 1):
    # uniform(-bound, bound) with bound = 1/sqrt(fan_in) = 1.0
    weight = jax.random.uniform(kw, (1, 1), minval=-1.0, maxval=1.0,
                                dtype=jnp.float32)
    bias = jax.random.uniform(kb, (1,), minval=-1.0, maxval=1.0,
                              dtype=jnp.float32)

    # 1) Small batch (module-scale demo) -> fused XLA fallback path.
    B_small = 8
    x_small = jax.random.normal(kx1, (B_small, 1), dtype=jnp.float32)
    out_small = jax.block_until_ready(perceptron_forward(x_small, weight, bias))
    ref_small = jnp.maximum(x_small @ weight.T + bias, 0.0)
    assert out_small.shape == (B_small, 1)
    assert jnp.allclose(out_small, ref_small, atol=1e-6), "small-batch mismatch"

    # 2) Larger batch (non-multiple of the tile footprint) -> Pallas kernel
    #    path, exercising padding, multiple grid steps and the slice-off.
    B_large = 70_000
    x_large = jax.random.normal(kx2, (B_large, 1), dtype=jnp.float32)
    out_large = jax.block_until_ready(perceptron_forward(x_large, weight, bias))
    ref_large = jnp.maximum(x_large @ weight.T + bias, 0.0)
    assert out_large.shape == (B_large, 1)
    assert jnp.allclose(out_large, ref_large, atol=1e-6), "large-batch mismatch"

    print("KERNEL_OK")
</pallas_src>

<mosaic_0001>
module attributes {stable_mosaic.version = 11 : i64} {
  func.func @_scale_bias_relu_kernel(%arg0: i32, %arg1: memref<512x128xf32, #tpu.memory_space<vmem>>, %arg2: memref<1x1xf32, #tpu.memory_space<smem>>, %arg3: memref<1x1xf32, #tpu.memory_space<smem>>, %arg4: memref<512x128xf32, #tpu.memory_space<vmem>>) attributes {dimension_semantics = [#tpu.dimension_semantics<parallel>], iteration_bounds = array<i64: 2>, scalar_prefetch = 0 : i64, scratch_operands = 0 : i64, tpu.core_type = #tpu.core_type<tc>, window_params = [{transform_indices = @transform_0, window_bounds = array<i64: 512, 128>}, {transform_indices = @transform_1, window_bounds = array<i64: 1, 1>}, {transform_indices = @transform_2, window_bounds = array<i64: 1, 1>}, {transform_indices = @transform_3, window_bounds = array<i64: 512, 128>}]} {
    %c0 = arith.constant 0 : index
    %c0_0 = arith.constant 0 : index
    %0 = memref.load %arg2[%c0, %c0_0] : memref<1x1xf32, #tpu.memory_space<smem>>
    %c0_1 = arith.constant 0 : index
    %c0_2 = arith.constant 0 : index
    %1 = memref.load %arg3[%c0_1, %c0_2] : memref<1x1xf32, #tpu.memory_space<smem>>
    %c0_3 = arith.constant 0 : index
    %c0_4 = arith.constant 0 : index
    %2 = vector.load %arg1[%c0_3, %c0_4] : memref<512x128xf32, #tpu.memory_space<vmem>>, vector<512x128xf32>
    %3 = vector.broadcast %0 : f32 to vector<512x128xf32>
    %4 = arith.mulf %2, %3 : vector<512x128xf32>
    %5 = vector.broadcast %1 : f32 to vector<512x128xf32>
    %6 = arith.addf %4, %5 : vector<512x128xf32>
    %cst = arith.constant 0.000000e+00 : f32
    %7 = vector.broadcast %cst : f32 to vector<512x128xf32>
    %8 = arith.maximumf %6, %7 : vector<512x128xf32>
    %c0_5 = arith.constant 0 : index
    %c0_6 = arith.constant 0 : index
    %9 = vector.load %arg4[%c0_5, %c0_6] : memref<512x128xf32, #tpu.memory_space<vmem>>, vector<512x128xf32>
    tpu.vector_store %arg4[%c0_5, %c0_6], %8 {strides = array<i32>} : memref<512x128xf32, #tpu.memory_space<vmem>>, vector<512x128xf32>,
    return
  }
  func.func @transform_0(%arg0: i32) -> (i32, i32) {
    %c0_i32 = arith.constant 0 : i32
    %c0_i32_0 = arith.constant 0 : i32
    return %arg0, %c0_i32 : i32, i32
  }
  func.func @transform_1(%arg0: i32) -> (i32, i32) {
    %c0_i32 = arith.constant 0 : i32
    %c0_i32_0 = arith.constant 0 : i32
    %c0_i32_1 = arith.constant 0 : i32
    return %c0_i32, %c0_i32_0 : i32, i32
  }
  func.func @transform_2(%arg0: i32) -> (i32, i32) {
    %c0_i32 = arith.constant 0 : i32
    %c0_i32_0 = arith.constant 0 : i32
    %c0_i32_1 = arith.constant 0 : i32
    return %c0_i32, %c0_i32_0 : i32, i32
  }
  func.func @transform_3(%arg0: i32) -> (i32, i32) {
    %c0_i32 = arith.constant 0 : i32
    %c0_i32_0 = arith.constant 0 : i32
    return %arg0, %c0_i32 : i32, i32
  }
}

</mosaic_0001>

<llo_original>
// kernel: tpu_custom_call.1
$region0: #{tpu_custom_call.1}
  #allocation0 [shape = 'u32[]', space=smem, size = 0x4, offset = 0x4, fixed_abs, tag = 'smem constant byte address 0x4 - core index']
  #allocation1 [shape = 'u32[72,128]{1,0:T(1,128)}', space=vmem, size = 0x9000, scoped, tag = 'internal scratch']
  #allocation2 [shape = 'f32[1,1]{1,0:T(1,128)S(6)}', space=smem, size = 0x200, scoped, tag = 'scoped memory for tpu_custom_call.1']
  #allocation3 [shape = 'f32[1,1]{1,0:T(1,128)S(6)}', space=smem, size = 0x200, scoped, tag = 'scoped memory for tpu_custom_call.1']
  %s0 = inlined_call_operand.hbm [shape: f32[1024,128], index: 0, kind: input, shape index: {}]
  %s1 = inlined_call_operand.<no memory space> [shape: f32[1,1], index: 1, kind: input, shape index: {}]
  %s2 = inlined_call_operand.<no memory space> [shape: f32[1,1], index: 2, kind: input, shape index: {}]
  %s3 = inlined_call_operand.hbm [shape: f32[1024,128], index: 3, kind: output, shape index: {}]
  %s4 = sld [smem:[#allocation0]]
  $region49: #{tpu_custom_call.1} parent=0
    _
  %s6 = ssub.s32 1, %s4
  %s7 = scalar_select 0, %s6, %s4
  %8 = sst [smem:[#allocation2]] %s1
  %9 = sst [smem:[#allocation3]] %s2
  $region1: #{tpu_custom_call.1} parent=0
    #allocation4 [shape = 'u8[524288]{0}', space=vmem, size = 0x80000, scoped, tag = 'input window, operand 0']
    #allocation5 [shape = 's32[2]{0}', space=sflag, size = 0x8, scoped, tag = 'scoped memory for tpu_custom_call.1']
    #allocation6 [shape = 's32[2]{0}', space=sflag, size = 0x8, scoped, tag = 'scoped memory for tpu_custom_call.1']
    #allocation7 [shape = 'u8[524288]{0}', space=vmem, size = 0x80000, scoped, tag = 'output window, operand 0']
    %10 = vsyncpa [#allocation5], 0
    %s11 = scalar_lea.sflag [#allocation5], 1
    %12 = vsyncpa %s11, 0
    %13 = vsyncpa [#allocation6], 0
    %s14 = scalar_lea.sflag [#allocation6], 1
    %15 = vsyncpa %s14, 0
    loop: start=0, step=1, limit=4
    $region2: #{tpu_custom_call.1} parent=1 // loop_pre_header
      _
    $region3: #{tpu_custom_call.1} parent=1 // loop_header
      %s17 = sphi 0, %s21
      %p18 = scmp.ge.s32.totalorder %s17, 4
      %s27 = sphi 0, %s29
      %s30 = sphi 0, %s27
      %s31 = sphi 0, %s30
      %s47 = sphi 0, %s31
      %s51 = sphi 0, %s51
      %s53 = sphi 0, %s51
      %s54 = sphi 0, %s53
      %s68 = sphi 0, %s54
      %s72 = sphi 0, %s72
      %s74 = sphi 0, %s72
      %s75 = sphi 0, %s74
      %s89 = sphi 0, %s75
      %s95 = sphi 0, %s97
      %s98 = sphi 0, %s95
      %s99 = sphi 0, %s98
      %s115 = sphi 0, %s99
    $region4: #{tpu_custom_call.1} parent=1 // loop_header_branch
      %20 = sbr.rel (%p18) target = $region8
    $region5: #{tpu_custom_call.1} parent=1 // loop_body
      %s22 = ssub.s32 %s17, 1
      %s23 = ssub.s32 %s17, 2
      %s24 = sadd.s32 %s17, 1
      %s25 = ssub.s32 %s17, %s24
      %p26 = scmp.eq.s32.totalorder %s25, 0
      %s28 = sadd.s32 %s27, 1
      %s29 = scalar_select %p26, %s27, %s28
      %p32 = pneg %p26
      %p33 = scmp.eq.s32.totalorder %s17, 1
      %p34 = por %p32, %p33
      %p35 = scmp.ne.s32.totalorder %s27, %s30
      %p36 = scmp.eq.s32.totalorder %s17, 0
      %p37 = por %p35, %p36
      %p38 = scmp.ne.s32.totalorder %s27, %s30
      %p39 = scmp.eq.s32.totalorder %s22, 1
      %p40 = por %p38, %p39
      %p41 = scmp.ne.s32.totalorder %s30, %s31
      %p42 = scmp.eq.s32.totalorder %s22, 0
      %p43 = por %p41, %p42
      %p44 = scmp.ne.s32.totalorder %s30, %s31
      %p45 = scmp.eq.s32.totalorder %s23, 1
      %p46 = por %p44, %p45
      %p48 = scmp.ne.s32.totalorder %s31, %s47
      %p49 = scmp.eq.s32.totalorder %s23, 0
      %p50 = por %p48, %p49
      %s52 = sadd.s32 %s51, 1
      %p55 = scmp.eq.s32.totalorder %s17, 1
      %p56 = scmp.ne.s32.totalorder %s51, %s53
      %p57 = scmp.eq.s32.totalorder %s17, 0
      %p58 = por %p56, %p57
      %p59 = scmp.ne.s32.totalorder %s51, %s53
      %p60 = scmp.eq.s32.totalorder %s22, 1
      %p61 = por %p59, %p60
      %p62 = scmp.ne.s32.totalorder %s53, %s54
      %p63 = scmp.eq.s32.totalorder %s22, 0
      %p64 = por %p62, %p63
      %p65 = scmp.ne.s32.totalorder %s53, %s54
      %p66 = scmp.eq.s32.totalorder %s23, 1
      %p67 = por %p65, %p66
      %p69 = scmp.ne.s32.totalorder %s54, %s68
      %p70 = scmp.eq.s32.totalorder %s23, 0
      %p71 = por %p69, %p70
      %s73 = sadd.s32 %s72, 1
      %p76 = scmp.eq.s32.totalorder %s17, 1
      %p77 = scmp.ne.s32.totalorder %s72, %s74
      %p78 = scmp.eq.s32.totalorder %s17, 0
      %p79 = por %p77, %p78
      %p80 = scmp.ne.s32.totalorder %s72, %s74
      %p81 = scmp.eq.s32.totalorder %s22, 1
      %p82 = por %p80, %p81
      %p83 = scmp.ne.s32.totalorder %s74, %s75
      %p84 = scmp.eq.s32.totalorder %s22, 0
      %p85 = por %p83, %p84
      %p86 = scmp.ne.s32.totalorder %s74, %s75
      %p87 = scmp.eq.s32.totalorder %s23, 1
      %p88 = por %p86, %p87
      %p90 = scmp.ne.s32.totalorder %s75, %s89
      %p91 = scmp.eq.s32.totalorder %s23, 0
      %p92 = por %p90, %p91
      %s93 = ssub.s32 %s17, %s24
      %p94 = scmp.eq.s32.totalorder %s93, 0
      %s96 = sadd.s32 %s95, 1
      %s97 = scalar_select %p94, %s95, %s96
      %p100 = pneg %p94
      %p101 = scmp.eq.s32.totalorder %s17, 1
      %p102 = por %p100, %p101
      %p103 = scmp.ne.s32.totalorder %s95, %s98
      %p104 = scmp.eq.s32.totalorder %s17, 0
      %p105 = por %p103, %p104
      %p106 = scmp.ne.s32.totalorder %s95, %s98
      %p107 = scmp.eq.s32.totalorder %s22, 1
      %p108 = por %p106, %p107
      %p109 = scmp.ne.s32.totalorder %s98, %s99
      %p110 = scmp.eq.s32.totalorder %s22, 0
      %p111 = por %p109, %p110
      %p112 = scmp.ne.s32.totalorder %s98, %s99
      %p113 = scmp.eq.s32.totalorder %s23, 1
      %p114 = por %p112, %p113
      %p116 = scmp.ne.s32.totalorder %s99, %s115
      %p117 = scmp.eq.s32.totalorder %s23, 0
      %p118 = por %p116, %p117
      %p119 = scmp.le.s32.totalorder 1, %s17
      %p120 = scmp.lt.s32.totalorder %s17, 3
      %p121 = pnand %p119, %p120
      %p122 = pneg %p121
      // Predicated region
      $region9: #{tpu_custom_call.1} parent=5 // pred_check
        _
      $region10: #{tpu_custom_call.1} parent=5 // pred_check_branch
        %124 = sbr.rel (%p121) target = $region12
      $region11: #{tpu_custom_call.1} parent=5 // pred_region
        %s125 = ssub.s32 %s17, 1
        // Predicated region
        $region13: #{tpu_custom_call.1} parent=11 // pred_check
          %p126 = pneg %p64
        $region14: #{tpu_custom_call.1} parent=11 // pred_check_branch
          %128 = sbr.rel (%p126) target = $region16
        $region15: #{tpu_custom_call.1} parent=11 // pred_region
          _
        $region16: #{tpu_custom_call.1} parent=11 // pred_fallthru
          _
        // Predicated region
        $region17: #{tpu_custom_call.1} parent=11 // pred_check
          %p129 = pneg %p85
        $region18: #{tpu_custom_call.1} parent=11 // pred_check_branch
          %131 = sbr.rel (%p129) target = $region20
        $region19: #{tpu_custom_call.1} parent=11 // pred_region
          _
        $region20: #{tpu_custom_call.1} parent=11 // pred_fallthru
          _
      $region12: #{tpu_custom_call.1} parent=5 // pred_fallthru
        _
      %p132 = scmp.lt.s32.totalorder %s17, 2
      // Predicated region
      $region21: #{tpu_custom_call.1} parent=5 // pred_check
        %p133 = pneg %p132
      $region22: #{tpu_custom_call.1} parent=5 // pred_check_branch
        %135 = sbr.rel (%p133) target = $region24
      $region23: #{tpu_custom_call.1} parent=5 // pred_region
        // Predicated region
        $region25: #{tpu_custom_call.1} parent=23 // pred_check
          %p136 = pneg %p37
        $region26: #{tpu_custom_call.1} parent=23 // pred_check_branch
          %138 = sbr.rel (%p136) target = $region28
        $region27: #{tpu_custom_call.1} parent=23 // pred_region
          %s139 = sand.u32 %s27, 1
          %s140 = scalar_lea.sflag [#allocation5], %s139
          %s141 = sand.u32 %s27, 1
          %s142 = smul.addr %s141, 512
          %s143 = scalar_lea.vmem [#allocation4], %s142
          %s144 = smul.u32 64, %s17
          %146 = vsyncadd %s140, 0
          %s147 = smul.addr %s144, 8
          %s148 = scalar_lea.hbm %s0, %s147
          %s149 = sshll.u32 %s148, 4
          %s150 = int_to_ptr.hbm [resolvable:$true] %s149
          %s151 = sshll.u32 %s143, 4
          %s152 = int_to_ptr.vmem [resolvable:$true] %s151
          %157 = dma.hbm_to_vmem [thread:$0]  %s150, 8192, %s152, %s140, 128, 128, 8
        $region28: #{tpu_custom_call.1} parent=23 // pred_fallthru
          _
      $region24: #{tpu_custom_call.1} parent=5 // pred_fallthru
        _
      %p158 = scmp.le.s32.totalorder 1, %s17
      %p159 = scmp.lt.s32.totalorder %s17, 3
      %p160 = pnand %p158, %p159
      %p161 = pneg %p160
      // Predicated region
      $region29: #{tpu_custom_call.1} parent=5 // pred_check
        _
      $region30: #{tpu_custom_call.1} parent=5 // pred_check_branch
        %163 = sbr.rel (%p160) target = $region32
      $region31: #{tpu_custom_call.1} parent=5 // pred_region
        %s164 = ssub.s32 %s17, 1
        %s165 = sand.u32 %s30, 1
        %s166 = scalar_lea.sflag [#allocation5], %s165
        %s167 = sand.u32 %s30, 1
        %s168 = smul.addr %s167, 512
        %s169 = scalar_lea.vmem [#allocation4], %s168
        // Predicated region
        $region33: #{tpu_custom_call.1} parent=31 // pred_check
          %p170 = pneg %p43
        $region34: #{tpu_custom_call.1} parent=31 // pred_check_branch
          %172 = sbr.rel (%p170) target = $region36
        $region35: #{tpu_custom_call.1} parent=31 // pred_region
          %174 = dma.done %s166, 8192
        $region36: #{tpu_custom_call.1} parent=31 // pred_fallthru
          _
        %s175 = sand.u32 %s30, 1
        %s176 = scalar_lea.sflag [#allocation5], %s175
        %s177 = sand.u32 %s30, 1
        %s178 = smul.addr %s177, 512
        %s179 = scalar_lea.vmem [#allocation4], %s178
        %p180 = pneg %p43
        %p181 = pneg %p40
        %p182 = pneg %p64
        %p183 = pneg %p61
        %p184 = pneg %p85
        %p185 = pneg %p82
        %p186 = pneg %p111
        %p187 = pneg %p108
        %s188 = sand.u32 %s98, 1
        %s189 = scalar_lea.sflag [#allocation6], %s188
        %s190 = sand.u32 %s98, 1
        %s191 = smul.addr %s190, 512
        %s192 = scalar_lea.vmem [#allocation7], %s191
        %s193 = smul.u32 64, %s22
        %s194 = smul.u32 64, %s22
        %s195 = sld [smem:[#allocation2]]
        %s196 = sld [smem:[#allocation3]]
        %v197 = vld [vmem:[%s169] sm:$0xff]
        %v198 = vld [vmem:[%s169 + $0x8] sm:$0xff]
        %v199 = vld [vmem:[%s169 + $0x10] sm:$0xff]
        %v200 = vld [vmem:[%s169 + $0x18] sm:$0xff]
        %v201 = vld [vmem:[%s169 + $0x20] sm:$0xff]
        %v202 = vld [vmem:[%s169 + $0x28] sm:$0xff]
        %v203 = vld [vmem:[%s169 + $0x30] sm:$0xff]
        %v204 = vld [vmem:[%s169 + $0x38] sm:$0xff]
        %v205 = vld [vmem:[%s169 + $0x40] sm:$0xff]
        %v206 = vld [vmem:[%s169 + $0x48] sm:$0xff]
        %v207 = vld [vmem:[%s169 + $0x50] sm:$0xff]
        %v208 = vld [vmem:[%s169 + $0x58] sm:$0xff]
        %v209 = vld [vmem:[%s169 + $0x60] sm:$0xff]
        %v210 = vld [vmem:[%s169 + $0x68] sm:$0xff]
        %v211 = vld [vmem:[%s169 + $0x70] sm:$0xff]
        %v212 = vld [vmem:[%s169 + $0x78] sm:$0xff]
        %v213 = vld [vmem:[%s169 + $0x80] sm:$0xff]
        %v214 = vld [vmem:[%s169 + $0x88] sm:$0xff]
        %v215 = vld [vmem:[%s169 + $0x90] sm:$0xff]
        %v216 = vld [vmem:[%s169 + $0x98] sm:$0xff]
        %v217 = vld [vmem:[%s169 + $0xa0] sm:$0xff]
        %v218 = vld [vmem:[%s169 + $0xa8] sm:$0xff]
        %v219 = vld [vmem:[%s169 + $0xb0] sm:$0xff]
        %v220 = vld [vmem:[%s169 + $0xb8] sm:$0xff]
        %v221 = vld [vmem:[%s169 + $0xc0] sm:$0xff]
        %v222 = vld [vmem:[%s169 + $0xc8] sm:$0xff]
        %v223 = vld [vmem:[%s169 + $0xd0] sm:$0xff]
        %v224 = vld [vmem:[%s169 + $0xd8] sm:$0xff]
        %v225 = vld [vmem:[%s169 + $0xe0] sm:$0xff]
        %v226 = vld [vmem:[%s169 + $0xe8] sm:$0xff]
        %v227 = vld [vmem:[%s169 + $0xf0] sm:$0xff]
        %v228 = vld [vmem:[%s169 + $0xf8] sm:$0xff]
        %v229 = vld [vmem:[%s169 + $0x100] sm:$0xff]
        %v230 = vld [vmem:[%s169 + $0x108] sm:$0xff]
        %v231 = vld [vmem:[%s169 + $0x110] sm:$0xff]
        %v232 = vld [vmem:[%s169 + $0x118] sm:$0xff]
        %v233 = vld [vmem:[%s169 + $0x120] sm:$0xff]
        %v234 = vld [vmem:[%s169 + $0x128] sm:$0xff]
        %v235 = vld [vmem:[%s169 + $0x130] sm:$0xff]
        %v236 = vld [vmem:[%s169 + $0x138] sm:$0xff]
        %v237 = vld [vmem:[%s169 + $0x140] sm:$0xff]
        %v238 = vld [vmem:[%s169 + $0x148] sm:$0xff]
        %v239 = vld [vmem:[%s169 + $0x150] sm:$0xff]
        %v240 = vld [vmem:[%s169 + $0x158] sm:$0xff]
        %v241 = vld [vmem:[%s169 + $0x160] sm:$0xff]
        %v242 = vld [vmem:[%s169 + $0x168] sm:$0xff]
        %v243 = vld [vmem:[%s169 + $0x170] sm:$0xff]
        %v244 = vld [vmem:[%s169 + $0x178] sm:$0xff]
        %v245 = vld [vmem:[%s169 + $0x180] sm:$0xff]
        %v246 = vld [vmem:[%s169 + $0x188] sm:$0xff]
        %v247 = vld [vmem:[%s169 + $0x190] sm:$0xff]
        %v248 = vld [vmem:[%s169 + $0x198] sm:$0xff]
        %v249 = vld [vmem:[%s169 + $0x1a0] sm:$0xff]
        %v250 = vld [vmem:[%s169 + $0x1a8] sm:$0xff]
        %v251 = vld [vmem:[%s169 + $0x1b0] sm:$0xff]
        %v252 = vld [vmem:[%s169 + $0x1b8] sm:$0xff]
        %v253 = vld [vmem:[%s169 + $0x1c0] sm:$0xff]
        %v254 = vld [vmem:[%s169 + $0x1c8] sm:$0xff]
        %v255 = vld [vmem:[%s169 + $0x1d0] sm:$0xff]
        %v256 = vld [vmem:[%s169 + $0x1d8] sm:$0xff]
        %v257 = vld [vmem:[%s169 + $0x1e0] sm:$0xff]
        %v258 = vld [vmem:[%s169 + $0x1e8] sm:$0xff]
        %v259 = vld [vmem:[%s169 + $0x1f0] sm:$0xff]
        %v260 = vld [vmem:[%s169 + $0x1f8] sm:$0xff]
        %v261 = vstv %s195
        %v262 = vmul.f32 %v197, %v261
        %v263 = vmul.f32 %v198, %v261
        %v264 = vmul.f32 %v199, %v261
        %v265 = vmul.f32 %v200, %v261
        %v266 = vmul.f32 %v201, %v261
        %v267 = vmul.f32 %v202, %v261
        %v268 = vmul.f32 %v203, %v261
        %v269 = vmul.f32 %v204, %v261
        %v270 = vmul.f32 %v205, %v261
        %v271 = vmul.f32 %v206, %v261
        %v272 = vmul.f32 %v207, %v261
        %v273 = vmul.f32 %v208, %v261
        %v274 = vmul.f32 %v209, %v261
        %v275 = vmul.f32 %v210, %v261
        %v276 = vmul.f32 %v211, %v261
        %v277 = vmul.f32 %v212, %v261
        %v278 = vmul.f32 %v213, %v261
        %v279 = vmul.f32 %v214, %v261
        %v280 = vmul.f32 %v215, %v261
        %v281 = vmul.f32 %v216, %v261
        %v282 = vmul.f32 %v217, %v261
        %v283 = vmul.f32 %v218, %v261
        %v284 = vmul.f32 %v219, %v261
        %v285 = vmul.f32 %v220, %v261
        %v286 = vmul.f32 %v221, %v261
        %v287 = vmul.f32 %v222, %v261
        %v288 = vmul.f32 %v223, %v261
        %v289 = vmul.f32 %v224, %v261
        %v290 = vmul.f32 %v225, %v261
        %v291 = vmul.f32 %v226, %v261
        %v292 = vmul.f32 %v227, %v261
        %v293 = vmul.f32 %v228, %v261
        %v294 = vmul.f32 %v229, %v261
        %v295 = vmul.f32 %v230, %v261
        %v296 = vmul.f32 %v231, %v261
        %v297 = vmul.f32 %v232, %v261
        %v298 = vmul.f32 %v233, %v261
        %v299 = vmul.f32 %v234, %v261
        %v300 = vmul.f32 %v235, %v261
        %v301 = vmul.f32 %v236, %v261
        %v302 = vmul.f32 %v237, %v261
        %v303 = vmul.f32 %v238, %v261
        %v304 = vmul.f32 %v239, %v261
        %v305 = vmul.f32 %v240, %v261
        %v306 = vmul.f32 %v241, %v261
        %v307 = vmul.f32 %v242, %v261
        %v308 = vmul.f32 %v243, %v261
        %v309 = vmul.f32 %v244, %v261
        %v310 = vmul.f32 %v245, %v261
        %v311 = vmul.f32 %v246, %v261
        %v312 = vmul.f32 %v247, %v261
        %v313 = vmul.f32 %v248, %v261
        %v314 = vmul.f32 %v249, %v261
        %v315 = vmul.f32 %v250, %v261
        %v316 = vmul.f32 %v251, %v261
        %v317 = vmul.f32 %v252, %v261
        %v318 = vmul.f32 %v253, %v261
        %v319 = vmul.f32 %v254, %v261
        %v320 = vmul.f32 %v255, %v261
        %v321 = vmul.f32 %v256, %v261
        %v322 = vmul.f32 %v257, %v261
        %v323 = vmul.f32 %v258, %v261
        %v324 = vmul.f32 %v259, %v261
        %v325 = vmul.f32 %v260, %v261
        %v326 = vstv %s196
        %v327 = vadd.f32 %v262, %v326
        %v328 = vadd.f32 %v263, %v326
        %v329 = vadd.f32 %v264, %v326
        %v330 = vadd.f32 %v265, %v326
        %v331 = vadd.f32 %v266, %v326
        %v332 = vadd.f32 %v267, %v326
        %v333 = vadd.f32 %v268, %v326
        %v334 = vadd.f32 %v269, %v326
        %v335 = vadd.f32 %v270, %v326
        %v336 = vadd.f32 %v271, %v326
        %v337 = vadd.f32 %v272, %v326
        %v338 = vadd.f32 %v273, %v326
        %v339 = vadd.f32 %v274, %v326
        %v340 = vadd.f32 %v275, %v326
        %v341 = vadd.f32 %v276, %v326
        %v342 = vadd.f32 %v277, %v326
        %v343 = vadd.f32 %v278, %v326
        %v344 = vadd.f32 %v279, %v326
        %v345 = vadd.f32 %v280, %v326
        %v346 = vadd.f32 %v281, %v326
        %v347 = vadd.f32 %v282, %v326
        %v348 = vadd.f32 %v283, %v326
        %v349 = vadd.f32 %v284, %v326
        %v350 = vadd.f32 %v285, %v326
        %v351 = vadd.f32 %v286, %v326
        %v352 = vadd.f32 %v287, %v326
        %v353 = vadd.f32 %v288, %v326
        %v354 = vadd.f32 %v289, %v326
        %v355 = vadd.f32 %v290, %v326
        %v356 = vadd.f32 %v291, %v326
        %v357 = vadd.f32 %v292, %v326
        %v358 = vadd.f32 %v293, %v326
        %v359 = vadd.f32 %v294, %v326
        %v360 = vadd.f32 %v295, %v326
        %v361 = vadd.f32 %v296, %v326
        %v362 = vadd.f32 %v297, %v326
        %v363 = vadd.f32 %v298, %v326
        %v364 = vadd.f32 %v299, %v326
        %v365 = vadd.f32 %v300, %v326
        %v366 = vadd.f32 %v301, %v326
        %v367 = vadd.f32 %v302, %v326
        %v368 = vadd.f32 %v303, %v326
        %v369 = vadd.f32 %v304, %v326
        %v370 = vadd.f32 %v305, %v326
        %v371 = vadd.f32 %v306, %v326
        %v372 = vadd.f32 %v307, %v326
        %v373 = vadd.f32 %v308, %v326
        %v374 = vadd.f32 %v309, %v326
        %v375 = vadd.f32 %v310, %v326
        %v376 = vadd.f32 %v311, %v326
        %v377 = vadd.f32 %v312, %v326
        %v378 = vadd.f32 %v313, %v326
        %v379 = vadd.f32 %v314, %v326
        %v380 = vadd.f32 %v315, %v326
        %v381 = vadd.f32 %v316, %v326
        %v382 = vadd.f32 %v317, %v326
        %v383 = vadd.f32 %v318, %v326
        %v384 = vadd.f32 %v319, %v326
        %v385 = vadd.f32 %v320, %v326
        %v386 = vadd.f32 %v321, %v326
        %v387 = vadd.f32 %v322, %v326
        %v388 = vadd.f32 %v323, %v326
        %v389 = vadd.f32 %v324, %v326
        %v390 = vadd.f32 %v325, %v326
        %v391 = vmax.f32 %v327, 0.0
        %v392 = vmax.f32 %v328, 0.0
        %v393 = vmax.f32 %v329, 0.0
        %v394 = vmax.f32 %v330, 0.0
        %v395 = vmax.f32 %v331, 0.0
        %v396 = vmax.f32 %v332, 0.0
        %v397 = vmax.f32 %v333, 0.0
        %v398 = vmax.f32 %v334, 0.0
        %v399 = vmax.f32 %v335, 0.0
        %v400 = vmax.f32 %v336, 0.0
        %v401 = vmax.f32 %v337, 0.0
        %v402 = vmax.f32 %v338, 0.0
        %v403 = vmax.f32 %v339, 0.0
        %v404 = vmax.f32 %v340, 0.0
        %v405 = vmax.f32 %v341, 0.0
        %v406 = vmax.f32 %v342, 0.0
        %v407 = vmax.f32 %v343, 0.0
        %v408 = vmax.f32 %v344, 0.0
        %v409 = vmax.f32 %v345, 0.0
        %v410 = vmax.f32 %v346, 0.0
        %v411 = vmax.f32 %v347, 0.0
        %v412 = vmax.f32 %v348, 0.0
        %v413 = vmax.f32 %v349, 0.0
        %v414 = vmax.f32 %v350, 0.0
        %v415 = vmax.f32 %v351, 0.0
        %v416 = vmax.f32 %v352, 0.0
        %v417 = vmax.f32 %v353, 0.0
        %v418 = vmax.f32 %v354, 0.0
        %v419 = vmax.f32 %v355, 0.0
        %v420 = vmax.f32 %v356, 0.0
        %v421 = vmax.f32 %v357, 0.0
        %v422 = vmax.f32 %v358, 0.0
        %v423 = vmax.f32 %v359, 0.0
        %v424 = vmax.f32 %v360, 0.0
        %v425 = vmax.f32 %v361, 0.0
        %v426 = vmax.f32 %v362, 0.0
        %v427 = vmax.f32 %v363, 0.0
        %v428 = vmax.f32 %v364, 0.0
        %v429 = vmax.f32 %v365, 0.0
        %v430 = vmax.f32 %v366, 0.0
        %v431 = vmax.f32 %v367, 0.0
        %v432 = vmax.f32 %v368, 0.0
        %v433 = vmax.f32 %v369, 0.0
        %v434 = vmax.f32 %v370, 0.0
        %v435 = vmax.f32 %v371, 0.0
        %v436 = vmax.f32 %v372, 0.0
        %v437 = vmax.f32 %v373, 0.0
        %v438 = vmax.f32 %v374, 0.0
        %v439 = vmax.f32 %v375, 0.0
        %v440 = vmax.f32 %v376, 0.0
        %v441 = vmax.f32 %v377, 0.0
        %v442 = vmax.f32 %v378, 0.0
        %v443 = vmax.f32 %v379, 0.0
        %v444 = vmax.f32 %v380, 0.0
        %v445 = vmax.f32 %v381, 0.0
        %v446 = vmax.f32 %v382, 0.0
        %v447 = vmax.f32 %v383, 0.0
        %v448 = vmax.f32 %v384, 0.0
        %v449 = vmax.f32 %v385, 0.0
        %v450 = vmax.f32 %v386, 0.0
        %v451 = vmax.f32 %v387, 0.0
        %v452 = vmax.f32 %v388, 0.0
        %v453 = vmax.f32 %v389, 0.0
        %v454 = vmax.f32 %v390, 0.0
        %455 = vst [vmem:[%s192] sm:$0xff] %v391
        %456 = vst [vmem:[%s192 + $0x8] sm:$0xff] %v392
        %457 = vst [vmem:[%s192 + $0x10] sm:$0xff] %v393
        %458 = vst [vmem:[%s192 + $0x18] sm:$0xff] %v394
        %459 = vst [vmem:[%s192 + $0x20] sm:$0xff] %v395
        %460 = vst [vmem:[%s192 + $0x28] sm:$0xff] %v396
        %461 = vst [vmem:[%s192 + $0x30] sm:$0xff] %v397
        %462 = vst [vmem:[%s192 + $0x38] sm:$0xff] %v398
        %463 = vst [vmem:[%s192 + $0x40] sm:$0xff] %v399
        %464 = vst [vmem:[%s192 + $0x48] sm:$0xff] %v400
        %465 = vst [vmem:[%s192 + $0x50] sm:$0xff] %v401
        %466 = vst [vmem:[%s192 + $0x58] sm:$0xff] %v402
        %467 = vst [vmem:[%s192 + $0x60] sm:$0xff] %v403
        %468 = vst [vmem:[%s192 + $0x68] sm:$0xff] %v404
        %469 = vst [vmem:[%s192 + $0x70] sm:$0xff] %v405
        %470 = vst [vmem:[%s192 + $0x78] sm:$0xff] %v406
        %471 = vst [vmem:[%s192 + $0x80] sm:$0xff] %v407
        %472 = vst [vmem:[%s192 + $0x88] sm:$0xff] %v408
        %473 = vst [vmem:[%s192 + $0x90] sm:$0xff] %v409
        %474 = vst [vmem:[%s192 + $0x98] sm:$0xff] %v410
        %475 = vst [vmem:[%s192 + $0xa0] sm:$0xff] %v411
        %476 = vst [vmem:[%s192 + $0xa8] sm:$0xff] %v412
        %477 = vst [vmem:[%s192 + $0xb0] sm:$0xff] %v413
        %478 = vst [vmem:[%s192 + $0xb8] sm:$0xff] %v414
        %479 = vst [vmem:[%s192 + $0xc0] sm:$0xff] %v415
        %480 = vst [vmem:[%s192 + $0xc8] sm:$0xff] %v416
        %481 = vst [vmem:[%s192 + $0xd0] sm:$0xff] %v417
        %482 = vst [vmem:[%s192 + $0xd8] sm:$0xff] %v418
        %483 = vst [vmem:[%s192 + $0xe0] sm:$0xff] %v419
        %484 = vst [vmem:[%s192 + $0xe8] sm:$0xff] %v420
        %485 = vst [vmem:[%s192 + $0xf0] sm:$0xff] %v421
        %486 = vst [vmem:[%s192 + $0xf8] sm:$0xff] %v422
        %487 = vst [vmem:[%s192 + $0x100] sm:$0xff] %v423
        %488 = vst [vmem:[%s192 + $0x108] sm:$0xff] %v424
        %489 = vst [vmem:[%s192 + $0x110] sm:$0xff] %v425
        %490 = vst [vmem:[%s192 + $0x118] sm:$0xff] %v426
        %491 = vst [vmem:[%s192 + $0x120] sm:$0xff] %v427
        %492 = vst [vmem:[%s192 + $0x128] sm:$0xff] %v428
        %493 = vst [vmem:[%s192 + $0x130] sm:$0xff] %v429
        %494 = vst [vmem:[%s192 + $0x138] sm:$0xff] %v430
        %495 = vst [vmem:[%s192 + $0x140] sm:$0xff] %v431
        %496 = vst [vmem:[%s192 + $0x148] sm:$0xff] %v432
        %497 = vst [vmem:[%s192 + $0x150] sm:$0xff] %v433
        %498 = vst [vmem:[%s192 + $0x158] sm:$0xff] %v434
        %499 = vst [vmem:[%s192 + $0x160] sm:$0xff] %v435
        %500 = vst [vmem:[%s192 + $0x168] sm:$0xff] %v436
        %501 = vst [vmem:[%s192 + $0x170] sm:$0xff] %v437
        %502 = vst [vmem:[%s192 + $0x178] sm:$0xff] %v438
        %503 = vst [vmem:[%s192 + $0x180] sm:$0xff] %v439
        %504 = vst [vmem:[%s192 + $0x188] sm:$0xff] %v440
        %505 = vst [vmem:[%s192 + $0x190] sm:$0xff] %v441
        %506 = vst [vmem:[%s192 + $0x198] sm:$0xff] %v442
        %507 = vst [vmem:[%s192 + $0x1a0] sm:$0xff] %v443
        %508 = vst [vmem:[%s192 + $0x1a8] sm:$0xff] %v444
        %509 = vst [vmem:[%s192 + $0x1b0] sm:$0xff] %v445
        %510 = vst [vmem:[%s192 + $0x1b8] sm:$0xff] %v446
        %511 = vst [vmem:[%s192 + $0x1c0] sm:$0xff] %v447
        %512 = vst [vmem:[%s192 + $0x1c8] sm:$0xff] %v448
        %513 = vst [vmem:[%s192 + $0x1d0] sm:$0xff] %v449
        %514 = vst [vmem:[%s192 + $0x1d8] sm:$0xff] %v450
        %515 = vst [vmem:[%s192 + $0x1e0] sm:$0xff] %v451
        %516 = vst [vmem:[%s192 + $0x1e8] sm:$0xff] %v452
        %517 = vst [vmem:[%s192 + $0x1f0] sm:$0xff] %v453
        %518 = vst [vmem:[%s192 + $0x1f8] sm:$0xff] %v454
        %s519 = sand.u32 %s98, 1
        %s520 = scalar_lea.sflag [#allocation6], %s519
        %s521 = sand.u32 %s98, 1
        %s522 = smul.addr %s521, 512
        %s523 = scalar_lea.vmem [#allocation7], %s522
        // Predicated region
        $region37: #{tpu_custom_call.1} parent=31 // pred_check
          %p524 = pneg %p108
        $region38: #{tpu_custom_call.1} parent=31 // pred_check_branch
          %526 = sbr.rel (%p524) target = $region40
        $region39: #{tpu_custom_call.1} parent=31 // pred_region
          %s527 = smul.u32 64, %s22
          %529 = vsyncadd %s520, 0
          %s530 = smul.addr %s527, 8
          %s531 = scalar_lea.hbm %s3, %s530
          %s532 = sshll.u32 %s523, 4
          %s533 = int_to_ptr.vmem [resolvable:$true] %s532
          %s534 = sshll.u32 %s531, 4
          %s535 = int_to_ptr.hbm [resolvable:$true] %s534
          %540 = dma.vmem_to_hbm [thread:$0]  %s533, 8192, %s535, %s520, 128, 128, 8
        $region40: #{tpu_custom_call.1} parent=31 // pred_fallthru
          _
      $region32: #{tpu_custom_call.1} parent=5 // pred_fallthru
        _
      %p541 = scmp.le.s32.totalorder 2, %s17
      // Predicated region
      $region41: #{tpu_custom_call.1} parent=5 // pred_check
        %p542 = pneg %p541
      $region42: #{tpu_custom_call.1} parent=5 // pred_check_branch
        %544 = sbr.rel (%p542) target = $region44
      $region43: #{tpu_custom_call.1} parent=5 // pred_region
        %s545 = ssub.s32 %s17, 2
        // Predicated region
        $region45: #{tpu_custom_call.1} parent=43 // pred_check
          %p546 = pneg %p114
        $region46: #{tpu_custom_call.1} parent=43 // pred_check_branch
          %548 = sbr.rel (%p546) target = $region48
        $region47: #{tpu_custom_call.1} parent=43 // pred_region
          %s549 = sand.u32 %s99, 1
          %s550 = scalar_lea.sflag [#allocation6], %s549
          %s551 = sand.u32 %s99, 1
          %s552 = smul.addr %s551, 512
          %s553 = scalar_lea.vmem [#allocation7], %s552
          %555 = dma.done %s550, 8192
        $region48: #{tpu_custom_call.1} parent=43 // pred_fallthru
          _
      $region44: #{tpu_custom_call.1} parent=5 // pred_fallthru
        _
    $region6: #{tpu_custom_call.1} parent=1 // loop_footer
      %s21 = sadd.s32 1, %s17
    $region7: #{tpu_custom_call.1} parent=1 // loop_footer_branch
      %16 = sbr.rel target = $region3
    $region8: #{tpu_custom_call.1} parent=1 // loop_exit
      _
    %556 = vsyncpa [#allocation5], 1
    %s557 = scalar_lea.sflag [#allocation5], 1
    %558 = vsyncpa %s557, 1
    %559 = vsyncpa [#allocation6], 1
    %s560 = scalar_lea.sflag [#allocation6], 1
    %561 = vsyncpa %s560, 1

</llo_original>
